<compile_context>
chip_gen: v7x
topology: tpu7x:2x2x1
jax: 0.10.0
libtpu: 0.0.40
codegen_flags: <defaults>
</compile_context>

<pallas_src>
import functools

import jax
import jax.numpy as jnp
from jax.experimental import pallas as pl
from jax.experimental.pallas import tpu as pltpu


def actor_kernel(state_ref, w_ref, b_ref, out_ref, *, S, H):
    """Fused TD3 Actor forward for one batch tile.

    Packed bf16 weight slab layout, (S + 2H) rows x 2H lanes:
      rows [0     , S    ) : [ rw1        | mw1s ]      fused layer-1 weight
      rows [S     , S + H) : [ rw2        | mw2  ]      hidden layers
      rows [S + H , S + 2H): lanes 0:H  = mw1r padded to (H, H)  (rows >= R are 0)
                             lanes H:2H = head block: rw3 @ lanes 0:R, mw3 @ lanes R:R+M
    f32 bias slab (8, 2H): row0=[rb1|mb1], row1=[rb2|mb2],
                           row2 lanes 0:R = rb3, lanes R:R+M = mb3, rest 0.

    Invariant relied on: mw1r rows >= R are exactly zero, so the (garbage) lanes
    >= R of the padded `rule` vector never contribute to the rule->mol dot.
    """
    bf16 = jnp.bfloat16
    o1, o2, o3 = 0, S, S + H          # row offsets of the three weight bands

    x = state_ref[...].astype(bf16)                                   # (B, S)

    # ---- fused layer 1: one MXU pass computes both state@rw1 and state@mw1s ----
    y = (jnp.dot(x, w_ref[o1:o2, :], preferred_element_type=jnp.float32)
         + b_ref[0:1, :])                                             # (B, 2H) f32
    h = jnp.maximum(y[:, :H], 0.0)          # rule branch hidden-1 (post-relu)
    pre_m = y[:, H:]                        # mol branch pre-activation: state@mw1s + mb1

    # ---- RuleActor tail ----
    h = jnp.maximum(
        jnp.dot(h.astype(bf16), w_ref[o2:o3, :H],
                preferred_element_type=jnp.float32) + b_ref[1:2, :H], 0.0)
    rule = jnp.tanh(
        jnp.dot(h.astype(bf16), w_ref[o3:, H:],
                preferred_element_type=jnp.float32) + b_ref[2:3, :H])
    # `rule` lanes 0:R are the real rule logits; lanes R:R+M hold h@mw3 garbage that is
    # (a) sliced away by the wrapper and (b) killed by the zero rows >= R of mw1r below.

    # ---- MolActor, conditioned on rule ----
    hm = jnp.maximum(
        pre_m + jnp.dot(rule.astype(bf16), w_ref[o3:, :H],
                        preferred_element_type=jnp.float32), 0.0)
    hm = jnp.maximum(
        jnp.dot(hm.astype(bf16), w_ref[o2:o3, H:],
                preferred_element_type=jnp.float32) + b_ref[1:2, H:], 0.0)
    mol = jnp.tanh(
        jnp.dot(hm.astype(bf16), w_ref[o3:, H:],
                preferred_element_type=jnp.float32) + b_ref[2:3, :H])
    # real mol logits live at lanes R:R+M of `mol` (head block layout).

    # Lane-dense fused output: [rule_block(H) | mol_block(H)], two aligned 128-lane stores.
    out_ref[:, :H] = rule
    out_ref[:, H:] = mol


def pack_params(p):
    """Pack the 13 parameter tensors into one bf16 weight slab and one f32 bias slab.

    Called ONCE at init / whenever params change — not inside the forward pass.
    """
    f32, bf16 = jnp.float32, jnp.bfloat16
    S, H = p["rw1"].shape
    R = p["rw3"].shape[1]
    M = p["mw3"].shape[1]

    w1 = jnp.concatenate([p["rw1"], p["mw1s"]], axis=1).astype(f32)        # (S, 2H)
    w2 = jnp.concatenate([p["rw2"], p["mw2"]], axis=1).astype(f32)         # (H, 2H)
    # Shared head block (H, H): rw3 in lanes 0:R, mw3 in lanes R:R+M, rest zero.
    head = jnp.zeros((H, H), f32).at[:, :R].set(p["rw3"]).at[:, R:R + M].set(p["mw3"])
    # mw1r padded to (H, H): rows >= R are zero (kernel invariant).
    w1r = jnp.zeros((H, H), f32).at[:R, :].set(p["mw1r"])
    tail = jnp.concatenate([w1r, head], axis=1)                            # (H, 2H)
    w_slab = jnp.concatenate([w1, w2, tail], axis=0).astype(bf16)          # (S+2H, 2H)

    b0 = jnp.concatenate([p["rb1"], p["mb1"]], axis=1).astype(f32)         # (1, 2H)
    b1 = jnp.concatenate([p["rb2"], p["mb2"]], axis=1).astype(f32)         # (1, 2H)
    bh = (jnp.zeros((1, 2 * H), f32)
          .at[:, :R].set(p["rb3"]).at[:, R:R + M].set(p["mb3"]))           # (1, 2H)
    b_slab = jnp.concatenate([b0, b1, bh, jnp.zeros((5, 2 * H), f32)], axis=0)  # (8, 2H)
    return w_slab, b_slab


def _pick_batch_tile(B):
    for t in (256, 128, 64, 32, 16, 8):
        if B % t == 0:
            return t
    return B


def actor_forward(state, w_slab, b_slab, *, rule_dim, mol_dim):
    """Run the fused Actor forward pass; slabs must come from pack_params()."""
    B, S = state.shape
    H = w_slab.shape[1] // 2

    tile_b = _pick_batch_tile(B)
    grid = (B // tile_b,)

    cost = pl.CostEstimate(
        flops=B * (4 * S * H + 10 * H * H),
        transcendentals=B * 2 * H,
        bytes_accessed=(4 * state.size + 2 * w_slab.size
                        + 4 * b_slab.size + 4 * B * 2 * H),
    )

    out = pl.pallas_call(
        functools.partial(actor_kernel, S=S, H=H),
        out_shape=jax.ShapeDtypeStruct((B, 2 * H), jnp.float32),
        grid=grid,
        in_specs=[
            pl.BlockSpec((tile_b, S), lambda i: (i, 0)),
            pl.BlockSpec((S + 2 * H, 2 * H), lambda i: (0, 0)),
            pl.BlockSpec((8, 2 * H), lambda i: (0, 0)),
        ],
        out_specs=pl.BlockSpec((tile_b, 2 * H), lambda i: (i, 0)),
        compiler_params=pltpu.CompilerParams(dimension_semantics=("parallel",)),
        cost_estimate=cost,
    )(state.astype(jnp.float32), w_slab, b_slab)

    rule = out[:, :rule_dim]
    mol = out[:, H + rule_dim: H + rule_dim + mol_dim]
    return rule, mol


def init_params(key, state_dim, hidden, rule_dim, mol_dim):
    ks = jax.random.split(key, 13)

    def lin(k, fan_in, fan_out):
        scale = 1.0 / jnp.sqrt(jnp.float32(fan_in))
        return jax.random.uniform(k, (fan_in, fan_out), jnp.float32, -scale, scale)

    def bias(k, fan_in, fan_out):
        scale = 1.0 / jnp.sqrt(jnp.float32(fan_in))
        return jax.random.uniform(k, (1, fan_out), jnp.float32, -scale, scale)

    params = {
        # RuleActor
        "rw1": lin(ks[0], state_dim, hidden),   "rb1": bias(ks[1], state_dim, hidden),
        "rw2": lin(ks[2], hidden, hidden),      "rb2": bias(ks[3], hidden, hidden),
        "rw3": lin(ks[4], hidden, rule_dim),    "rb3": bias(ks[5], hidden, rule_dim),
        # MolActor (first layer split into state / rule slices of the concat weight)
        "mw1s": lin(ks[6], state_dim, hidden),
        "mw1r": lin(ks[7], rule_dim, hidden),
        "mb1": bias(ks[8], state_dim + rule_dim, hidden),
        "mw2": lin(ks[9], hidden, hidden),      "mb2": bias(ks[10], hidden, hidden),
        "mw3": lin(ks[11], hidden, mol_dim),    "mb3": bias(ks[12], hidden, mol_dim),
    }
    return params


def actor_forward_ref(state, p):
    """Pure-JAX f32 reference for correctness checking."""
    h = jax.nn.relu(state @ p["rw1"] + p["rb1"])
    h = jax.nn.relu(h @ p["rw2"] + p["rb2"])
    rule = jnp.tanh(h @ p["rw3"] + p["rb3"])
    xcat = jnp.concatenate([state, rule], axis=-1)
    w1 = jnp.concatenate([p["mw1s"], p["mw1r"]], axis=0)
    hm = jax.nn.relu(xcat @ w1 + p["mb1"])
    hm = jax.nn.relu(hm @ p["mw2"] + p["mb2"])
    mol = jnp.tanh(hm @ p["mw3"] + p["mb3"])
    return rule, mol


if __name__ == "__main__":
    B, STATE_DIM, HIDDEN, RULE_DIM, MOL_DIM = 2, 32, 128, 8, 8

    key = jax.random.PRNGKey(0)
    k_state, k_params = jax.random.split(key)
    state = jax.random.normal(k_state, (B, STATE_DIM), jnp.float32)
    params = init_params(k_params, STATE_DIM, HIDDEN, RULE_DIM, MOL_DIM)

    # Pack once at parameter-creation time (not per forward call).
    w_slab, b_slab = pack_params(params)

    fwd = jax.jit(actor_forward, static_argnames=("rule_dim", "mol_dim"))
    rule, mol = fwd(state, w_slab, b_slab, rule_dim=RULE_DIM, mol_dim=MOL_DIM)
    jax.block_until_ready((rule, mol))

    rule_ref, mol_ref = actor_forward_ref(state, params)
    assert rule.shape == (B, RULE_DIM) and mol.shape == (B, MOL_DIM)
    # bf16 weights on the MXU (f32 accumulation) -> relaxed tolerance vs f32 reference.
    assert jnp.allclose(rule, rule_ref, atol=2e-2, rtol=2e-2)
    assert jnp.allclose(mol, mol_ref, atol=2e-2, rtol=2e-2)

    print("KERNEL_OK")
</pallas_src>

<mosaic_0001>
module attributes {stable_mosaic.version = 11 : i64} {
  func.func @actor_kernel(%arg0: i32, %arg1: memref<2x32xf32, #tpu.memory_space<vmem>>, %arg2: memref<288x256xbf16, #tpu.memory_space<vmem>>, %arg3: memref<8x256xf32, #tpu.memory_space<vmem>>, %arg4: memref<2x256xf32, #tpu.memory_space<vmem>>) attributes {dimension_semantics = [#tpu.dimension_semantics<parallel>], iteration_bounds = array<i64: 1>, scalar_prefetch = 0 : i64, scratch_operands = 0 : i64, tpu.core_type = #tpu.core_type<tc>, window_params = [{transform_indices = @transform_0, window_bounds = array<i64: 2, 32>}, {pipeline_mode = #tpu.pipeline_mode<synchronous>, transform_indices = @transform_1, window_bounds = array<i64: 288, 256>}, {pipeline_mode = #tpu.pipeline_mode<synchronous>, transform_indices = @transform_2, window_bounds = array<i64: 8, 256>}, {transform_indices = @transform_3, window_bounds = array<i64: 2, 256>}]} {
    %c0 = arith.constant 0 : index
    %c0_0 = arith.constant 0 : index
    %0 = vector.load %arg1[%c0, %c0_0] : memref<2x32xf32, #tpu.memory_space<vmem>>, vector<2x32xf32>
    %1 = arith.truncf %0 : vector<2x32xf32> to vector<2x32xbf16>
    %c0_1 = arith.constant 0 : index
    %c0_2 = arith.constant 0 : index
    %2 = vector.load %arg2[%c0_1, %c0_2] : memref<288x256xbf16, #tpu.memory_space<vmem>>, vector<32x256xbf16>
    %cst = arith.constant dense<0.000000e+00> : vector<2x256xf32>
    %3 = tpu.matmul %1, %2, %cst {dimension_numbers = #tpu.dot_dimension_numbers<[1], [0], [0], [1], [0, 0, 1, 1], [], []>} : vector<2x32xbf16>, vector<32x256xbf16>, vector<2x256xf32> -> vector<2x256xf32>
    %c0_3 = arith.constant 0 : index
    %c0_4 = arith.constant 0 : index
    %4 = vector.load %arg3[%c0_3, %c0_4] : memref<8x256xf32, #tpu.memory_space<vmem>>, vector<1x256xf32>
    %5 = vector.broadcast %4 : vector<1x256xf32> to vector<2x256xf32>
    %6 = arith.addf %3, %5 : vector<2x256xf32>
    %7 = vector.extract_strided_slice %6 {offsets = [0, 0], sizes = [2, 128], strides = [1, 1]} : vector<2x256xf32> to vector<2x128xf32>
    %cst_5 = arith.constant 0.000000e+00 : f32
    %8 = vector.broadcast %cst_5 : f32 to vector<2x128xf32>
    %9 = arith.maximumf %7, %8 : vector<2x128xf32>
    %10 = vector.extract_strided_slice %6 {offsets = [0, 128], sizes = [2, 128], strides = [1, 1]} : vector<2x256xf32> to vector<2x128xf32>
    %11 = arith.truncf %9 : vector<2x128xf32> to vector<2x128xbf16>
    %c32 = arith.constant 32 : index
    %c0_6 = arith.constant 0 : index
    %12 = vector.load %arg2[%c32, %c0_6] : memref<288x256xbf16, #tpu.memory_space<vmem>>, vector<128x128xbf16>
    %cst_7 = arith.constant dense<0.000000e+00> : vector<2x128xf32>
    %13 = tpu.matmul %11, %12, %cst_7 {dimension_numbers = #tpu.dot_dimension_numbers<[1], [0], [0], [1], [0, 0, 1, 1], [], []>} : vector<2x128xbf16>, vector<128x128xbf16>, vector<2x128xf32> -> vector<2x128xf32>
    %c1 = arith.constant 1 : index
    %c0_8 = arith.constant 0 : index
    %14 = vector.load %arg3[%c1, %c0_8] : memref<8x256xf32, #tpu.memory_space<vmem>>, vector<1x128xf32>
    %15 = vector.broadcast %14 : vector<1x128xf32> to vector<2x128xf32>
    %16 = arith.addf %13, %15 : vector<2x128xf32>
    %cst_9 = arith.constant 0.000000e+00 : f32
    %17 = vector.broadcast %cst_9 : f32 to vector<2x128xf32>
    %18 = arith.maximumf %16, %17 : vector<2x128xf32>
    %19 = arith.truncf %18 : vector<2x128xf32> to vector<2x128xbf16>
    %c160 = arith.constant 160 : index
    %c128 = arith.constant 128 : index
    %20 = vector.load %arg2[%c160, %c128] : memref<288x256xbf16, #tpu.memory_space<vmem>>, vector<128x128xbf16>
    %cst_10 = arith.constant dense<0.000000e+00> : vector<2x128xf32>
    %21 = tpu.matmul %19, %20, %cst_10 {dimension_numbers = #tpu.dot_dimension_numbers<[1], [0], [0], [1], [0, 0, 1, 1], [], []>} : vector<2x128xbf16>, vector<128x128xbf16>, vector<2x128xf32> -> vector<2x128xf32>
    %c2 = arith.constant 2 : index
    %c0_11 = arith.constant 0 : index
    %22 = vector.load %arg3[%c2, %c0_11] : memref<8x256xf32, #tpu.memory_space<vmem>>, vector<1x128xf32>
    %23 = vector.broadcast %22 : vector<1x128xf32> to vector<2x128xf32>
    %24 = arith.addf %21, %23 : vector<2x128xf32>
    %25 = math.tanh %24 : vector<2x128xf32>
    %26 = arith.truncf %25 : vector<2x128xf32> to vector<2x128xbf16>
    %c160_12 = arith.constant 160 : index
    %c0_13 = arith.constant 0 : index
    %27 = vector.load %arg2[%c160_12, %c0_13] : memref<288x256xbf16, #tpu.memory_space<vmem>>, vector<128x128xbf16>
    %cst_14 = arith.constant dense<0.000000e+00> : vector<2x128xf32>
    %28 = tpu.matmul %26, %27, %cst_14 {dimension_numbers = #tpu.dot_dimension_numbers<[1], [0], [0], [1], [0, 0, 1, 1], [], []>} : vector<2x128xbf16>, vector<128x128xbf16>, vector<2x128xf32> -> vector<2x128xf32>
    %29 = arith.addf %10, %28 : vector<2x128xf32>
    %cst_15 = arith.constant 0.000000e+00 : f32
    %30 = vector.broadcast %cst_15 : f32 to vector<2x128xf32>
    %31 = arith.maximumf %29, %30 : vector<2x128xf32>
    %32 = arith.truncf %31 : vector<2x128xf32> to vector<2x128xbf16>
    %c32_16 = arith.constant 32 : index
    %c128_17 = arith.constant 128 : index
    %33 = vector.load %arg2[%c32_16, %c128_17] : memref<288x256xbf16, #tpu.memory_space<vmem>>, vector<128x128xbf16>
    %cst_18 = arith.constant dense<0.000000e+00> : vector<2x128xf32>
    %34 = tpu.matmul %32, %33, %cst_18 {dimension_numbers = #tpu.dot_dimension_numbers<[1], [0], [0], [1], [0, 0, 1, 1], [], []>} : vector<2x128xbf16>, vector<128x128xbf16>, vector<2x128xf32> -> vector<2x128xf32>
    %c1_19 = arith.constant 1 : index
    %c128_20 = arith.constant 128 : index
    %35 = vector.load %arg3[%c1_19, %c128_20] : memref<8x256xf32, #tpu.memory_space<vmem>>, vector<1x128xf32>
    %36 = vector.broadcast %35 : vector<1x128xf32> to vector<2x128xf32>
    %37 = arith.addf %34, %36 : vector<2x128xf32>
    %cst_21 = arith.constant 0.000000e+00 : f32
    %38 = vector.broadcast %cst_21 : f32 to vector<2x128xf32>
    %39 = arith.maximumf %37, %38 : vector<2x128xf32>
    %40 = arith.truncf %39 : vector<2x128xf32> to vector<2x128xbf16>
    %c160_22 = arith.constant 160 : index
    %c128_23 = arith.constant 128 : index
    %41 = vector.load %arg2[%c160_22, %c128_23] : memref<288x256xbf16, #tpu.memory_space<vmem>>, vector<128x128xbf16>
    %cst_24 = arith.constant dense<0.000000e+00> : vector<2x128xf32>
    %42 = tpu.matmul %40, %41, %cst_24 {dimension_numbers = #tpu.dot_dimension_numbers<[1], [0], [0], [1], [0, 0, 1, 1], [], []>} : vector<2x128xbf16>, vector<128x128xbf16>, vector<2x128xf32> -> vector<2x128xf32>
    %c2_25 = arith.constant 2 : index
    %c0_26 = arith.constant 0 : index
    %43 = vector.load %arg3[%c2_25, %c0_26] : memref<8x256xf32, #tpu.memory_space<vmem>>, vector<1x128xf32>
    %44 = vector.broadcast %43 : vector<1x128xf32> to vector<2x128xf32>
    %45 = arith.addf %42, %44 : vector<2x128xf32>
    %46 = math.tanh %45 : vector<2x128xf32>
    %c0_27 = arith.constant 0 : index
    %c0_28 = arith.constant 0 : index
    %47 = vector.load %arg4[%c0_27, %c0_28] : memref<2x256xf32, #tpu.memory_space<vmem>>, vector<2x128xf32>
    tpu.vector_store %arg4[%c0_27, %c0_28], %25 {strides = array<i32>} : memref<2x256xf32, #tpu.memory_space<vmem>>, vector<2x128xf32>,
    %c0_29 = arith.constant 0 : index
    %c128_30 = arith.constant 128 : index
    %48 = vector.load %arg4[%c0_29, %c128_30] : memref<2x256xf32, #tpu.memory_space<vmem>>, vector<2x128xf32>
    tpu.vector_store %arg4[%c0_29, %c128_30], %46 {strides = array<i32>} : memref<2x256xf32, #tpu.memory_space<vmem>>, vector<2x128xf32>,
    return
  }
  func.func @transform_0(%arg0: i32) -> (i32, i32) {
    %c0_i32 = arith.constant 0 : i32
    %c0_i32_0 = arith.constant 0 : i32
    return %arg0, %c0_i32 : i32, i32
  }
  func.func @transform_1(%arg0: i32) -> (i32, i32) {
    %c0_i32 = arith.constant 0 : i32
    %c0_i32_0 = arith.constant 0 : i32
    %c0_i32_1 = arith.constant 0 : i32
    return %c0_i32, %c0_i32_0 : i32, i32
  }
  func.func @transform_2(%arg0: i32) -> (i32, i32) {
    %c0_i32 = arith.constant 0 : i32
    %c0_i32_0 = arith.constant 0 : i32
    %c0_i32_1 = arith.constant 0 : i32
    return %c0_i32, %c0_i32_0 : i32, i32
  }
  func.func @transform_3(%arg0: i32) -> (i32, i32) {
    %c0_i32 = arith.constant 0 : i32
    %c0_i32_0 = arith.constant 0 : i32
    return %arg0, %c0_i32 : i32, i32
  }
}

</mosaic_0001>

<llo_original>
// kernel: actor_forward.1
$region0: #{actor_forward.1}
  #allocation0 [shape = 'u32[]', space=smem, size = 0x4, offset = 0x4, fixed_abs, tag = 'smem constant byte address 0x4 - core index']
  #allocation1 [shape = 'u32[144,128]{1,0:T(1,128)}', space=vmem, size = 0x12000, scoped, tag = 'internal scratch']
  %s0 = inlined_call_operand.hbm [shape: f32[2,32], index: 0, kind: input, shape index: {}]
  %s1 = inlined_call_operand.hbm [shape: bf16[288,256], index: 1, kind: input, shape index: {}]
  %s2 = inlined_call_operand.hbm [shape: f32[8,256], index: 2, kind: input, shape index: {}]
  %s3 = inlined_call_operand.vmem [shape: f32[2,256], index: 3, kind: output, shape index: {}]
  %s4 = sld [smem:[#allocation0]]
  $region34: #{actor_forward.1} parent=0
    _
  %s6 = ssub.s32 1, %s4
  %s7 = scalar_select 0, %s6, %s4
  $region1: #{actor_forward.1} parent=0
    #allocation2 [shape = 'u8[1024]{0}', space=vmem, size = 0x400, scoped, tag = 'input window, operand 0, single buffered']
    #allocation3 [shape = 's32[1]{0}', space=sflag, size = 0x4, scoped, tag = 'scoped memory for actor_forward.1']
    #allocation4 [shape = 'u8[147456]{0}', space=vmem, size = 0x24000, scoped, tag = 'input window, operand 1, single buffered']
    #allocation5 [shape = 's32[1]{0}', space=sflag, size = 0x4, scoped, tag = 'scoped memory for actor_forward.1']
    #allocation6 [shape = 'u8[8192]{0}', space=vmem, size = 0x2000, scoped, tag = 'input window, operand 2, single buffered']
    %8 = vsyncpa [#allocation3], 0
    %9 = vsyncpa [#allocation5], 0
    // Predicated region
    $region2: #{actor_forward.1} parent=1 // pred_check
      _
    $region3: #{actor_forward.1} parent=1 // pred_check_branch
      %11 = sbr.rel (0) target = $region5
    $region4: #{actor_forward.1} parent=1 // pred_region
      %s13 = ssub.s32 32, 32
      %14 = vsyncadd [#allocation3], %s13
      %s16 = sshll.u32 [#allocation2], 4
      %s17 = int_to_ptr.vmem [resolvable:$true] %s16
      %19 = dma.hbm_to_vmem [thread:$0]  %s0, 32, %s17, [#allocation3]
    $region5: #{actor_forward.1} parent=1 // pred_fallthru
      _
    // Predicated region
    $region6: #{actor_forward.1} parent=1 // pred_check
      _
    $region7: #{actor_forward.1} parent=1 // pred_check_branch
      %21 = sbr.rel (0) target = $region9
    $region8: #{actor_forward.1} parent=1 // pred_region
      %s23 = ssub.s32 4608, 4608
      %24 = vsyncadd [#allocation5], %s23
      %s25 = sshll.u32 [#allocation4], 4
      %s26 = int_to_ptr.vmem [resolvable:$true] %s25
      %31 = dma.hbm_to_vmem [thread:$0]  %s1, 4608, %s26, [#allocation5], 128, 128, 8
    $region9: #{actor_forward.1} parent=1 // pred_fallthru
      _
    // Predicated region
    $region10: #{actor_forward.1} parent=1 // pred_check
      _
    $region11: #{actor_forward.1} parent=1 // pred_check_branch
      %33 = sbr.rel (0) target = $region13
    $region12: #{actor_forward.1} parent=1 // pred_region
      %s35 = ssub.s32 256, 256
      %36 = vsyncadd [#allocation5], %s35
      %s38 = sshll.u32 [#allocation6], 4
      %s39 = int_to_ptr.vmem [resolvable:$true] %s38
      %41 = dma.hbm_to_vmem [thread:$0]  %s2, 256, %s39, [#allocation5]
    $region13: #{actor_forward.1} parent=1 // pred_fallthru
      _
    // Predicated region
    $region14: #{actor_forward.1} parent=1 // pred_check
      _
    $region15: #{actor_forward.1} parent=1 // pred_check_branch
      %43 = sbr.rel (0) target = $region17
    $region16: #{actor_forward.1} parent=1 // pred_region
      %44 = dma.done [#allocation3], 32
    $region17: #{actor_forward.1} parent=1 // pred_fallthru
      _
    // Predicated region
    $region18: #{actor_forward.1} parent=1 // pred_check
      _
    $region19: #{actor_forward.1} parent=1 // pred_check_branch
      %46 = sbr.rel (0) target = $region21
    $region20: #{actor_forward.1} parent=1 // pred_region
      %47 = dma.done [#allocation5], 4608
    $region21: #{actor_forward.1} parent=1 // pred_fallthru
      _
    // Predicated region
    $region22: #{actor_forward.1} parent=1 // pred_check
      _
    $region23: #{actor_forward.1} parent=1 // pred_check_branch
      %49 = sbr.rel (0) target = $region25
    $region24: #{actor_forward.1} parent=1 // pred_region
      %50 = dma.done [#allocation5], 256
    $region25: #{actor_forward.1} parent=1 // pred_fallthru
      _
    %v52 = vld [vmem:[#allocation2] sm:$0x3]
    %v53 = vpack.c.bf16 %v52, %v52
    %v54 = vld [vmem:[#allocation4] sm:$0xff]
    %v55 = vld [vmem:[#allocation4 + $0x8] sm:$0xff]
    %v56 = vld [vmem:[#allocation4 + $0x10] sm:$0xff]
    %v57 = vld [vmem:[#allocation4 + $0x18] sm:$0xff]
    %v58 = vld [vmem:[#allocation6] ss:$8 sm:$0x3]
    %v60 = vlaneseq
    %v61 = vshrl.u32 %v60, 7
    %v62 = vsub.s32 0, %v61
    %v63 = vrot.slane %v58, %v62
    %v64 = vlaneseq
    %v65 = vshrl.u32 %v64, 7
    %v66 = vsub.s32 1, %v65
    %v67 = vrot.slane %v58, %v66
    %v74 = vunpack.c.l.b16 %v54
    %v75 = vunpack.c.h.b16 %v54
    %v76 = vunpack.c.l.b16 %v55
    %v77 = vunpack.c.h.b16 %v55
    %v78 = vunpack.c.l.b16 %v56
    %v79 = vunpack.c.h.b16 %v56
    %v80 = vunpack.c.l.b16 %v57
    %v81 = vunpack.c.h.b16 %v57
    %v82 = vpack.c.b16 %v76, %v74
    %v83 = vpack.c.b16 %v77, %v75
    %v84 = vpack.c.b16 %v80, %v78
    %v85 = vpack.c.b16 %v81, %v79
    %vm90 = vcmask 261120
    %v92 = vsel %vm90, %v53, 0
    %94 = vmatprep.subr.bf16.mxu0 %v83
    %95 = vmatpush1.bf16.msra.mxu0 %v82
    %96 = vmatprep.subr.bf16.mxu0 %v85
    %97 = vmatpush1.bf16.msra.mxu0 %v84
    %98 = vmatprep.subr.bf16.mxu0 0
    %99 = vmatpush1.bf16.msra.mxu0 0
    %100 = vmatprep.subr.bf16.mxu0 0
    %101 = vmatpush1.bf16.msra.mxu0 0
    %102 = vmatprep.subr.bf16.mxu0 0
    %103 = vmatpush1.bf16.msra.mxu0 0
    %104 = vmatprep.subr.bf16.mxu0 0
    %105 = vmatpush1.bf16.msra.mxu0 0
    %106 = vmatprep.subr.bf16.mxu0 0
    %107 = vmatpush1.bf16.msra.mxu0 0
    %108 = vmatprep.subr.bf16.mxu0 0
    %109 = vmatpush1.bf16.msra.mxu0 0
    %110 = vmatprep.subr.bf16.mxu0 0
    %111 = vmatpush1.bf16.msra.mxu0 0
    %112 = vmatprep.subr.bf16.mxu0 0
    %113 = vmatpush1.bf16.msra.mxu0 0
    %114 = vmatprep.subr.bf16.mxu0 0
    %115 = vmatpush1.bf16.msra.mxu0 0
    %116 = vmatprep.subr.bf16.mxu0 0
    %117 = vmatpush1.bf16.msra.mxu0 0
    %118 = vmatprep.subr.bf16.mxu0 0
    %119 = vmatpush1.bf16.msra.mxu0 0
    %120 = vmatprep.subr.bf16.mxu0 0
    %121 = vmatpush1.bf16.msra.mxu0 0
    %122 = vmatprep.subr.bf16.mxu0 0
    %123 = vmatpush1.bf16.msra.mxu0 0
    %124 = vmatprep.subr.bf16.mxu0 0
    %125 = vmatpush1.bf16.msra.mxu0 0
    %126 = vmatprep.mubr.bf16.mxu0 0
    %127 = vmatmul.mubr.bf16.gmra.mrb[0].mxu0 %v92
    %v128 = vpop.f32.mrb[0].mxu0
    %v129 = vadd.f32 %v63, %v128
    %v130 = vpop.f32.mrb[0].mxu0
    %v131 = vadd.f32 %v67, %v130
    %v132 = vpop.f32.mrb[0].mxu0
    %v133 = vpop.f32.mrb[0].mxu0
    %134 = vdwg.mxu0
    %v135 = vmax.f32 %v129, 0.0
    %v136 = vpack.c.bf16 %v135, %v135
    %v137 = vld [vmem:[#allocation4 + $0x20] sm:$0xf]
    %v138 = vld [vmem:[#allocation4 + $0x28] sm:$0xf]
    %v139 = vld [vmem:[#allocation4 + $0x30] sm:$0xf]
    %v140 = vld [vmem:[#allocation4 + $0x38] sm:$0xf]
    %v141 = vld [vmem:[#allocation4 + $0x40] sm:$0xf]
    %v142 = vld [vmem:[#allocation4 + $0x48] sm:$0xf]
    %v143 = vld [vmem:[#allocation4 + $0x50] sm:$0xf]
    %v144 = vld [vmem:[#allocation4 + $0x58] sm:$0xf]
    %v145 = vld [vmem:[#allocation4 + $0x60] sm:$0xf]
    %v146 = vld [vmem:[#allocation4 + $0x68] sm:$0xf]
    %v147 = vld [vmem:[#allocation4 + $0x70] sm:$0xf]
    %v148 = vld [vmem:[#allocation4 + $0x78] sm:$0xf]
    %v149 = vld [vmem:[#allocation4 + $0x80] sm:$0xf]
    %v150 = vld [vmem:[#allocation4 + $0x88] sm:$0xf]
    %v151 = vld [vmem:[#allocation4 + $0x90] sm:$0xf]
    %v152 = vld [vmem:[#allocation4 + $0x98] sm:$0xf]
    %v153 = vld [vmem:[#allocation6 + $0x1] ss:$0 sm:$0xff]
    %v170 = vunpack.c.l.b16 %v137
    %v171 = vunpack.c.l.b16 %v138
    %v172 = vunpack.c.l.b16 %v139
    %v173 = vunpack.c.l.b16 %v140
    %v174 = vunpack.c.l.b16 %v141
    %v175 = vunpack.c.l.b16 %v142
    %v176 = vunpack.c.l.b16 %v143
    %v177 = vunpack.c.l.b16 %v144
    %v178 = vunpack.c.l.b16 %v145
    %v179 = vunpack.c.l.b16 %v146
    %v180 = vunpack.c.l.b16 %v147
    %v181 = vunpack.c.l.b16 %v148
    %v182 = vunpack.c.l.b16 %v149
    %v183 = vunpack.c.l.b16 %v150
    %v184 = vunpack.c.l.b16 %v151
    %v185 = vunpack.c.l.b16 %v152
    %v186 = vpack.c.b16 %v171, %v170
    %v187 = vpack.c.b16 %v173, %v172
    %v188 = vpack.c.b16 %v175, %v174
    %v189 = vpack.c.b16 %v177, %v176
    %v190 = vpack.c.b16 %v179, %v178
    %v191 = vpack.c.b16 %v181, %v180
    %v192 = vpack.c.b16 %v183, %v182
    %v193 = vpack.c.b16 %v185, %v184
    %202 = vmatprep.subr.bf16.mxu0 0
    %203 = vmatpush1.bf16.msra.mxu0 %v186
    %204 = vmatprep.subr.bf16.mxu0 0
    %205 = vmatpush1.bf16.msra.mxu0 %v187
    %206 = vmatprep.subr.bf16.mxu0 0
    %207 = vmatpush1.bf16.msra.mxu0 %v188
    %208 = vmatprep.subr.bf16.mxu0 0
    %209 = vmatpush1.bf16.msra.mxu0 %v189
    %210 = vmatprep.subr.bf16.mxu0 0
    %211 = vmatpush1.bf16.msra.mxu0 %v190
    %212 = vmatprep.subr.bf16.mxu0 0
    %213 = vmatpush1.bf16.msra.mxu0 %v191
    %214 = vmatprep.subr.bf16.mxu0 0
    %215 = vmatpush1.bf16.msra.mxu0 %v192
    %216 = vmatprep.subr.bf16.mxu0 0
    %217 = vmatpush1.bf16.msra.mxu0 %v193
    %218 = vmatprep.subr.bf16.mxu0 0
    %219 = vmatpush1.bf16.msra.mxu0 0
    %220 = vmatprep.subr.bf16.mxu0 0
    %221 = vmatpush1.bf16.msra.mxu0 0
    %222 = vmatprep.subr.bf16.mxu0 0
    %223 = vmatpush1.bf16.msra.mxu0 0
    %224 = vmatprep.subr.bf16.mxu0 0
    %225 = vmatpush1.bf16.msra.mxu0 0
    %226 = vmatprep.subr.bf16.mxu0 0
    %227 = vmatpush1.bf16.msra.mxu0 0
    %228 = vmatprep.subr.bf16.mxu0 0
    %229 = vmatpush1.bf16.msra.mxu0 0
    %230 = vmatprep.subr.bf16.mxu0 0
    %231 = vmatpush1.bf16.msra.mxu0 0
    %232 = vmatprep.subr.bf16.mxu0 0
    %233 = vmatpush1.bf16.msra.mxu0 0
    %234 = vmatprep.mubr.bf16.mxu0 0
    %235 = vmatmul.mubr.bf16.gmra.mrb[0].mxu0 %v136
    %v236 = vpop.f32.mrb[0].mxu0
    %v237 = vadd.f32 %v153, %v236
    %v238 = vpop.f32.mrb[0].mxu0
    %v239 = vpop.f32.mrb[0].mxu0
    %v240 = vpop.f32.mrb[0].mxu0
    %241 = vdwg.mxu0
    %v242 = vmax.f32 %v237, 0.0
    %v243 = vpack.c.bf16 %v242, %v242
    %v244 = vld [vmem:[#allocation4 + $0xa4] sm:$0xf]
    %v245 = vld [vmem:[#allocation4 + $0xac] sm:$0xf]
    %v246 = vld [vmem:[#allocation4 + $0xb4] sm:$0xf]
    %v247 = vld [vmem:[#allocation4 + $0xbc] sm:$0xf]
    %v248 = vld [vmem:[#allocation4 + $0xc4] sm:$0xf]
    %v249 = vld [vmem:[#allocation4 + $0xcc] sm:$0xf]
    %v250 = vld [vmem:[#allocation4 + $0xd4] sm:$0xf]
    %v251 = vld [vmem:[#allocation4 + $0xdc] sm:$0xf]
    %v252 = vld [vmem:[#allocation4 + $0xe4] sm:$0xf]
    %v253 = vld [vmem:[#allocation4 + $0xec] sm:$0xf]
    %v254 = vld [vmem:[#allocation4 + $0xf4] sm:$0xf]
    %v255 = vld [vmem:[#allocation4 + $0xfc] sm:$0xf]
    %v256 = vld [vmem:[#allocation4 + $0x104] sm:$0xf]
    %v257 = vld [vmem:[#allocation4 + $0x10c] sm:$0xf]
    %v258 = vld [vmem:[#allocation4 + $0x114] sm:$0xf]
    %v259 = vld [vmem:[#allocation4 + $0x11c] sm:$0xf]
    %v260 = vld [vmem:[#allocation6 + $0x2] ss:$0 sm:$0xff]
    %v277 = vunpack.c.l.b16 %v244
    %v278 = vunpack.c.l.b16 %v245
    %v279 = vunpack.c.l.b16 %v246
    %v280 = vunpack.c.l.b16 %v247
    %v281 = vunpack.c.l.b16 %v248
    %v282 = vunpack.c.l.b16 %v249
    %v283 = vunpack.c.l.b16 %v250
    %v284 = vunpack.c.l.b16 %v251
    %v285 = vunpack.c.l.b16 %v252
    %v286 = vunpack.c.l.b16 %v253
    %v287 = vunpack.c.l.b16 %v254
    %v288 = vunpack.c.l.b16 %v255
    %v289 = vunpack.c.l.b16 %v256
    %v290 = vunpack.c.l.b16 %v257
    %v291 = vunpack.c.l.b16 %v258
    %v292 = vunpack.c.l.b16 %v259
    %v293 = vpack.c.b16 %v278, %v277
    %v294 = vpack.c.b16 %v280, %v279
    %v295 = vpack.c.b16 %v282, %v281
    %v296 = vpack.c.b16 %v284, %v283
    %v297 = vpack.c.b16 %v286, %v285
    %v298 = vpack.c.b16 %v288, %v287
    %v299 = vpack.c.b16 %v290, %v289
    %v300 = vpack.c.b16 %v292, %v291
    %309 = vmatprep.subr.bf16.mxu0 0
    %310 = vmatpush1.bf16.msra.mxu0 %v293
    %311 = vmatprep.subr.bf16.mxu0 0
    %312 = vmatpush1.bf16.msra.mxu0 %v294
    %313 = vmatprep.subr.bf16.mxu0 0
    %314 = vmatpush1.bf16.msra.mxu0 %v295
    %315 = vmatprep.subr.bf16.mxu0 0
    %316 = vmatpush1.bf16.msra.mxu0 %v296
    %317 = vmatprep.subr.bf16.mxu0 0
    %318 = vmatpush1.bf16.msra.mxu0 %v297
    %319 = vmatprep.subr.bf16.mxu0 0
    %320 = vmatpush1.bf16.msra.mxu0 %v298
    %321 = vmatprep.subr.bf16.mxu0 0
    %322 = vmatpush1.bf16.msra.mxu0 %v299
    %323 = vmatprep.subr.bf16.mxu0 0
    %324 = vmatpush1.bf16.msra.mxu0 %v300
    %325 = vmatprep.subr.bf16.mxu0 0
    %326 = vmatpush1.bf16.msra.mxu0 0
    %327 = vmatprep.subr.bf16.mxu0 0
    %328 = vmatpush1.bf16.msra.mxu0 0
    %329 = vmatprep.subr.bf16.mxu0 0
    %330 = vmatpush1.bf16.msra.mxu0 0
    %331 = vmatprep.subr.bf16.mxu0 0
    %332 = vmatpush1.bf16.msra.mxu0 0
    %333 = vmatprep.subr.bf16.mxu0 0
    %334 = vmatpush1.bf16.msra.mxu0 0
    %335 = vmatprep.subr.bf16.mxu0 0
    %336 = vmatpush1.bf16.msra.mxu0 0
    %337 = vmatprep.subr.bf16.mxu0 0
    %338 = vmatpush1.bf16.msra.mxu0 0
    %339 = vmatprep.subr.bf16.mxu0 0
    %340 = vmatpush1.bf16.msra.mxu0 0
    %341 = vmatprep.mubr.bf16.mxu0 0
    %342 = vmatmul.mubr.bf16.gmra.mrb[0].mxu0 %v243
    %v343 = vpop.f32.mrb[0].mxu0
    %v344 = vadd.f32 %v260, %v343
    %v345 = vpop.f32.mrb[0].mxu0
    %v346 = vpop.f32.mrb[0].mxu0
    %v347 = vpop.f32.mrb[0].mxu0
    %348 = vdwg.mxu0
    %v349 = vtanh.pop %v344
    %v350 = vpack.c.bf16 %v349, %v349
    %v351 = vld [vmem:[#allocation4 + $0xa0] sm:$0xf]
    %v352 = vld [vmem:[#allocation4 + $0xa8] sm:$0xf]
    %v353 = vld [vmem:[#allocation4 + $0xb0] sm:$0xf]
    %v354 = vld [vmem:[#allocation4 + $0xb8] sm:$0xf]
    %v355 = vld [vmem:[#allocation4 + $0xc0] sm:$0xf]
    %v356 = vld [vmem:[#allocation4 + $0xc8] sm:$0xf]
    %v357 = vld [vmem:[#allocation4 + $0xd0] sm:$0xf]
    %v358 = vld [vmem:[#allocation4 + $0xd8] sm:$0xf]
    %v359 = vld [vmem:[#allocation4 + $0xe0] sm:$0xf]
    %v360 = vld [vmem:[#allocation4 + $0xe8] sm:$0xf]
    %v361 = vld [vmem:[#allocation4 + $0xf0] sm:$0xf]
    %v362 = vld [vmem:[#allocation4 + $0xf8] sm:$0xf]
    %v363 = vld [vmem:[#allocation4 + $0x100] sm:$0xf]
    %v364 = vld [vmem:[#allocation4 + $0x108] sm:$0xf]
    %v365 = vld [vmem:[#allocation4 + $0x110] sm:$0xf]
    %v366 = vld [vmem:[#allocation4 + $0x118] sm:$0xf]
    %v383 = vunpack.c.l.b16 %v351
    %v384 = vunpack.c.l.b16 %v352
    %v385 = vunpack.c.l.b16 %v353
    %v386 = vunpack.c.l.b16 %v354
    %v387 = vunpack.c.l.b16 %v355
    %v388 = vunpack.c.l.b16 %v356
    %v389 = vunpack.c.l.b16 %v357
    %v390 = vunpack.c.l.b16 %v358
    %v391 = vunpack.c.l.b16 %v359
    %v392 = vunpack.c.l.b16 %v360
    %v393 = vunpack.c.l.b16 %v361
    %v394 = vunpack.c.l.b16 %v362
    %v395 = vunpack.c.l.b16 %v363
    %v396 = vunpack.c.l.b16 %v364
    %v397 = vunpack.c.l.b16 %v365
    %v398 = vunpack.c.l.b16 %v366
    %v399 = vpack.c.b16 %v384, %v383
    %v400 = vpack.c.b16 %v386, %v385
    %v401 = vpack.c.b16 %v388, %v387
    %v402 = vpack.c.b16 %v390, %v389
    %v403 = vpack.c.b16 %v392, %v391
    %v404 = vpack.c.b16 %v394, %v393
    %v405 = vpack.c.b16 %v396, %v395
    %v406 = vpack.c.b16 %v398, %v397
    %415 = vmatprep.subr.bf16.mxu0 0
    %416 = vmatpush1.bf16.msra.mxu0 %v399
    %417 = vmatprep.subr.bf16.mxu0 0
    %418 = vmatpush1.bf16.msra.mxu0 %v400
    %419 = vmatprep.subr.bf16.mxu0 0
    %420 = vmatpush1.bf16.msra.mxu0 %v401
    %421 = vmatprep.subr.bf16.mxu0 0
    %422 = vmatpush1.bf16.msra.mxu0 %v402
    %423 = vmatprep.subr.bf16.mxu0 0
    %424 = vmatpush1.bf16.msra.mxu0 %v403
    %425 = vmatprep.subr.bf16.mxu0 0
    %426 = vmatpush1.bf16.msra.mxu0 %v404
    %427 = vmatprep.subr.bf16.mxu0 0
    %428 = vmatpush1.bf16.msra.mxu0 %v405
    %429 = vmatprep.subr.bf16.mxu0 0
    %430 = vmatpush1.bf16.msra.mxu0 %v406
    %431 = vmatprep.subr.bf16.mxu0 0
    %432 = vmatpush1.bf16.msra.mxu0 0
    %433 = vmatprep.subr.bf16.mxu0 0
    %434 = vmatpush1.bf16.msra.mxu0 0
    %435 = vmatprep.subr.bf16.mxu0 0
    %436 = vmatpush1.bf16.msra.mxu0 0
    %437 = vmatprep.subr.bf16.mxu0 0
    %438 = vmatpush1.bf16.msra.mxu0 0
    %439 = vmatprep.subr.bf16.mxu0 0
    %440 = vmatpush1.bf16.msra.mxu0 0
    %441 = vmatprep.subr.bf16.mxu0 0
    %442 = vmatpush1.bf16.msra.mxu0 0
    %443 = vmatprep.subr.bf16.mxu0 0
    %444 = vmatpush1.bf16.msra.mxu0 0
    %445 = vmatprep.subr.bf16.mxu0 0
    %446 = vmatpush1.bf16.msra.mxu0 0
    %447 = vmatprep.mubr.bf16.mxu0 0
    %448 = vmatmul.mubr.bf16.gmra.mrb[0].mxu0 %v350
    %v449 = vpop.f32.mrb[0].mxu0
    %v450 = vadd.f32 0.0, %v449
    %v451 = vpop.f32.mrb[0].mxu0
    %v452 = vpop.f32.mrb[0].mxu0
    %v453 = vpop.f32.mrb[0].mxu0
    %454 = vdwg.mxu0
    %v455 = vadd.f32 %v131, %v450
    %v456 = vmax.f32 %v455, 0.0
    %v457 = vpack.c.bf16 %v456, %v456
    %v458 = vld [vmem:[#allocation4 + $0x24] sm:$0xf]
    %v459 = vld [vmem:[#allocation4 + $0x2c] sm:$0xf]
    %v460 = vld [vmem:[#allocation4 + $0x34] sm:$0xf]
    %v461 = vld [vmem:[#allocation4 + $0x3c] sm:$0xf]
    %v462 = vld [vmem:[#allocation4 + $0x44] sm:$0xf]
    %v463 = vld [vmem:[#allocation4 + $0x4c] sm:$0xf]
    %v464 = vld [vmem:[#allocation4 + $0x54] sm:$0xf]
    %v465 = vld [vmem:[#allocation4 + $0x5c] sm:$0xf]
    %v466 = vld [vmem:[#allocation4 + $0x64] sm:$0xf]
    %v467 = vld [vmem:[#allocation4 + $0x6c] sm:$0xf]
    %v468 = vld [vmem:[#allocation4 + $0x74] sm:$0xf]
    %v469 = vld [vmem:[#allocation4 + $0x7c] sm:$0xf]
    %v470 = vld [vmem:[#allocation4 + $0x84] sm:$0xf]
    %v471 = vld [vmem:[#allocation4 + $0x8c] sm:$0xf]
    %v472 = vld [vmem:[#allocation4 + $0x94] sm:$0xf]
    %v473 = vld [vmem:[#allocation4 + $0x9c] sm:$0xf]
    %v474 = vld [vmem:[#allocation6 + $0x9] ss:$0 sm:$0xff]
    %v491 = vunpack.c.l.b16 %v458
    %v492 = vunpack.c.l.b16 %v459
    %v493 = vunpack.c.l.b16 %v460
    %v494 = vunpack.c.l.b16 %v461
    %v495 = vunpack.c.l.b16 %v462
    %v496 = vunpack.c.l.b16 %v463
    %v497 = vunpack.c.l.b16 %v464
    %v498 = vunpack.c.l.b16 %v465
    %v499 = vunpack.c.l.b16 %v466
    %v500 = vunpack.c.l.b16 %v467
    %v501 = vunpack.c.l.b16 %v468
    %v502 = vunpack.c.l.b16 %v469
    %v503 = vunpack.c.l.b16 %v470
    %v504 = vunpack.c.l.b16 %v471
    %v505 = vunpack.c.l.b16 %v472
    %v506 = vunpack.c.l.b16 %v473
    %v507 = vpack.c.b16 %v492, %v491
    %v508 = vpack.c.b16 %v494, %v493
    %v509 = vpack.c.b16 %v496, %v495
    %v510 = vpack.c.b16 %v498, %v497
    %v511 = vpack.c.b16 %v500, %v499
    %v512 = vpack.c.b16 %v502, %v501
    %v513 = vpack.c.b16 %v504, %v503
    %v514 = vpack.c.b16 %v506, %v505
    %523 = vmatprep.subr.bf16.mxu0 0
    %524 = vmatpush1.bf16.msra.mxu0 %v507
    %525 = vmatprep.subr.bf16.mxu0 0
    %526 = vmatpush1.bf16.msra.mxu0 %v508
    %527 = vmatprep.subr.bf16.mxu0 0
    %528 = vmatpush1.bf16.msra.mxu0 %v509
    %529 = vmatprep.subr.bf16.mxu0 0
    %530 = vmatpush1.bf16.msra.mxu0 %v510
    %531 = vmatprep.subr.bf16.mxu0 0
    %532 = vmatpush1.bf16.msra.mxu0 %v511
    %533 = vmatprep.subr.bf16.mxu0 0
    %534 = vmatpush1.bf16.msra.mxu0 %v512
    %535 = vmatprep.subr.bf16.mxu0 0
    %536 = vmatpush1.bf16.msra.mxu0 %v513
    %537 = vmatprep.subr.bf16.mxu0 0
    %538 = vmatpush1.bf16.msra.mxu0 %v514
    %539 = vmatprep.subr.bf16.mxu0 0
    %540 = vmatpush1.bf16.msra.mxu0 0
    %541 = vmatprep.subr.bf16.mxu0 0
    %542 = vmatpush1.bf16.msra.mxu0 0
    %543 = vmatprep.subr.bf16.mxu0 0
    %544 = vmatpush1.bf16.msra.mxu0 0
    %545 = vmatprep.subr.bf16.mxu0 0
    %546 = vmatpush1.bf16.msra.mxu0 0
    %547 = vmatprep.subr.bf16.mxu0 0
    %548 = vmatpush1.bf16.msra.mxu0 0
    %549 = vmatprep.subr.bf16.mxu0 0
    %550 = vmatpush1.bf16.msra.mxu0 0
    %551 = vmatprep.subr.bf16.mxu0 0
    %552 = vmatpush1.bf16.msra.mxu0 0
    %553 = vmatprep.subr.bf16.mxu0 0
    %554 = vmatpush1.bf16.msra.mxu0 0
    %555 = vmatprep.mubr.bf16.mxu0 0
    %556 = vmatmul.mubr.bf16.gmra.mrb[0].mxu0 %v457
    %v557 = vpop.f32.mrb[0].mxu0
    %v558 = vadd.f32 %v474, %v557
    %v559 = vpop.f32.mrb[0].mxu0
    %v560 = vpop.f32.mrb[0].mxu0
    %v561 = vpop.f32.mrb[0].mxu0
    %562 = vdwg.mxu0
    %v563 = vmax.f32 %v558, 0.0
    %v564 = vpack.c.bf16 %v563, %v563
    %565 = vmatprep.subr.bf16.mxu0 0
    %566 = vmatpush1.bf16.msra.mxu0 %v293
    %567 = vmatprep.subr.bf16.mxu0 0
    %568 = vmatpush1.bf16.msra.mxu0 %v294
    %569 = vmatprep.subr.bf16.mxu0 0
    %570 = vmatpush1.bf16.msra.mxu0 %v295
    %571 = vmatprep.subr.bf16.mxu0 0
    %572 = vmatpush1.bf16.msra.mxu0 %v296
    %573 = vmatprep.subr.bf16.mxu0 0
    %574 = vmatpush1.bf16.msra.mxu0 %v297
    %575 = vmatprep.subr.bf16.mxu0 0
    %576 = vmatpush1.bf16.msra.mxu0 %v298
    %577 = vmatprep.subr.bf16.mxu0 0
    %578 = vmatpush1.bf16.msra.mxu0 %v299
    %579 = vmatprep.subr.bf16.mxu0 0
    %580 = vmatpush1.bf16.msra.mxu0 %v300
    %581 = vmatprep.subr.bf16.mxu0 0
    %582 = vmatpush1.bf16.msra.mxu0 0
    %583 = vmatprep.subr.bf16.mxu0 0
    %584 = vmatpush1.bf16.msra.mxu0 0
    %585 = vmatprep.subr.bf16.mxu0 0
    %586 = vmatpush1.bf16.msra.mxu0 0
    %587 = vmatprep.subr.bf16.mxu0 0
    %588 = vmatpush1.bf16.msra.mxu0 0
    %589 = vmatprep.subr.bf16.mxu0 0
    %590 = vmatpush1.bf16.msra.mxu0 0
    %591 = vmatprep.subr.bf16.mxu0 0
    %592 = vmatpush1.bf16.msra.mxu0 0
    %593 = vmatprep.subr.bf16.mxu0 0
    %594 = vmatpush1.bf16.msra.mxu0 0
    %595 = vmatprep.subr.bf16.mxu0 0
    %596 = vmatpush1.bf16.msra.mxu0 0
    %597 = vmatprep.mubr.bf16.mxu0 0
    %598 = vmatmul.mubr.bf16.gmra.mrb[0].mxu0 %v564
    %v599 = vpop.f32.mrb[0].mxu0
    %v600 = vadd.f32 %v260, %v599
    %v601 = vpop.f32.mrb[0].mxu0
    %v602 = vpop.f32.mrb[0].mxu0
    %v603 = vpop.f32.mrb[0].mxu0
    %604 = vdwg.mxu0
    %v605 = vtanh.pop %v600
    %606 = vst [vmem:[%s3] sm:$0x3] %v349
    %607 = vst [vmem:[%s3 + $0x2] sm:$0x3] %v605
    // Predicated region
    $region26: #{actor_forward.1} parent=1 // pred_check
      _
    $region27: #{actor_forward.1} parent=1 // pred_check_branch
      %609 = sbr.rel (0) target = $region29
    $region28: #{actor_forward.1} parent=1 // pred_region
      _
    $region29: #{actor_forward.1} parent=1 // pred_fallthru
      _
    // Predicated region
    $region30: #{actor_forward.1} parent=1 // pred_check
      _
    $region31: #{actor_forward.1} parent=1 // pred_check_branch
      %611 = sbr.rel (0) target = $region33
    $region32: #{actor_forward.1} parent=1 // pred_region
      _
    $region33: #{actor_forward.1} parent=1 // pred_fallthru
      _
    %612 = vsyncpa [#allocation3], 1
    %613 = vsyncpa [#allocation5], 1

</llo_original>
